<compile_context>
chip_gen: v7x
topology: tpu7x:2x2x1
jax: 0.10.0
libtpu: 0.0.40
codegen_flags: <defaults>
</compile_context>

<pallas_src>
import functools

import jax
import jax.numpy as jnp
from jax import lax
from jax.experimental import pallas as pl
from jax.experimental.pallas import tpu as pltpu

EPS = 1e-5


def _conv_taps(xb, w, *, length, k, pad_l, pad_r):
    """k-tap 'same' conv with L on the lane axis.

    xb: (B, Cin, L)   f32 input block
    w:  (Cout, Cin*K) f32 weights flattened as w[o, c*K + t]
    returns (B, Cout, L) f32
    """
    bsz, cin, _ = xb.shape
    # Zero-fill the halo columns in VMEM (replaces the old HBM jnp.pad).
    pieces = []
    if pad_l:
        pieces.append(jnp.zeros((bsz, cin, pad_l), xb.dtype))
    pieces.append(xb)
    if pad_r:
        pieces.append(jnp.zeros((bsz, cin, pad_r), xb.dtype))
    xp = pieces[0] if len(pieces) == 1 else jnp.concatenate(pieces, axis=-1)

    acc = None
    for c in range(cin):                    # static unroll: Cin*K (=9) VPU MACs
        for t in range(k):
            xs = xp[:, c:c + 1, t:t + length]        # (B, 1, L) shifted input row
            wc = w[:, c * k + t:c * k + t + 1]       # (Cout, 1) weight column
            term = wc * xs                           # broadcast -> (B, Cout, L)
            acc = term if acc is None else acc + term
    return acc


def _stats_kernel(x_ref, w_ref, stats_ref, *, length, k, pad_l, pad_r):
    # x_ref: (B1, Cin, L); w_ref: (Cout, Cin*K);
    # stats_ref: (Cout, 2) resident accumulator [sum, sum_of_squares].
    @pl.when(pl.program_id(0) == 0)
    def _():
        stats_ref[...] = jnp.zeros_like(stats_ref)

    y = _conv_taps(x_ref[...].astype(jnp.float32), w_ref[...].astype(jnp.float32),
                   length=length, k=k, pad_l=pad_l, pad_r=pad_r)      # (B1, Cout, L)
    yb = jnp.sum(y, axis=0)                                           # (Cout, L)
    yb2 = jnp.sum(y * y, axis=0)                                      # (Cout, L)
    s = jnp.sum(yb, axis=-1, keepdims=True)                           # (Cout, 1)
    ss = jnp.sum(yb2, axis=-1, keepdims=True)                         # (Cout, 1)
    stats_ref[...] += jnp.concatenate([s, ss], axis=-1)               # (Cout, 2)


def _apply_kernel(x_ref, w_ref, scale_ref, shift_ref, o_ref, *, length, k, pad_l, pad_r):
    # x_ref: (B2, Cin, L); scale/shift: (Cout, 1); o_ref: (B2, Cout, L), NCL.
    y = _conv_taps(x_ref[...].astype(jnp.float32), w_ref[...].astype(jnp.float32),
                   length=length, k=k, pad_l=pad_l, pad_r=pad_r)      # (B2, Cout, L)
    y = y * scale_ref[...] + shift_ref[...]                           # folded BN affine
    o_ref[...] = jnp.maximum(y, 0.0).astype(o_ref.dtype)              # ReLU


def _pick_batch_block(n, bytes_per_elem, target_bytes, min_grid=1):
    """Largest divisor b of n with b*bytes_per_elem <= target, keeping >= min_grid steps."""
    best = 1
    for b in range(1, n + 1):
        if n % b:
            continue
        if n // b < min_grid and b > 1:
            continue
        if b == 1 or b * bytes_per_elem <= target_bytes:
            best = b
    return best


def _vmem_limit(block_bytes):
    """VMEM budget: never below actual need, ceiling ~75% of physical VMEM."""
    need = 2 * block_bytes + (2 << 20)          # double-buffered blocks + weights/slack
    try:
        cap = pltpu.get_tpu_info().vmem_capacity_bytes
    except Exception:
        cap = 64 << 20                          # conservative (v7x per-core) fallback
    ceiling = (cap * 3) // 4                    # ~96 MiB v5e/v6e, ~48 MiB v7x
    limit = min(max(need, 16 << 20), ceiling)
    return int(max(limit, need))                # never clamp below need


@functools.partial(jax.jit, static_argnames=("kernel_size",))
def conv_block(x_ncl, weight_oik, gamma, beta, *, kernel_size=3):
    """x_ncl: (N, Cin, L); weight_oik: (Cout, Cin, K). Returns (N, Cout, L) in x's dtype."""
    n, cin, length = x_ncl.shape
    cout, _, k = weight_oik.shape
    assert k == kernel_size

    pad_l = (k - 1) // 2
    pad_r = (k - 1) - pad_l

    w2d = weight_oik.reshape(cout, cin * k)       # w[o, c*K + t]; dtype untouched
    x_isz = x_ncl.dtype.itemsize
    w_isz = weight_oik.dtype.itemsize
    o_dtype = x_ncl.dtype
    o_isz = jnp.dtype(o_dtype).itemsize

    conv_flops = 2 * n * cout * length * cin * k

    # ---- pass 1: per-channel sum / sum-of-squares in a resident (Cout,2) block ----
    per_elem1 = cin * length * x_isz + cout * length * 4     # input + f32 conv intermediate
    b1 = _pick_batch_block(n, per_elem1, target_bytes=2 << 20)
    params1 = pltpu.CompilerParams(
        dimension_semantics=("arbitrary",),       # accumulator resident across batch axis
        vmem_limit_bytes=_vmem_limit(b1 * per_elem1),
    )
    stats = pl.pallas_call(
        functools.partial(_stats_kernel, length=length, k=k, pad_l=pad_l, pad_r=pad_r),
        out_shape=jax.ShapeDtypeStruct((cout, 2), jnp.float32),
        grid=(n // b1,),
        in_specs=[
            pl.BlockSpec((b1, cin, length), lambda i: (i, 0, 0)),
            pl.BlockSpec((cout, cin * k), lambda i: (0, 0)),
        ],
        out_specs=pl.BlockSpec((cout, 2), lambda i: (0, 0)),
        compiler_params=params1,
        cost_estimate=pl.CostEstimate(
            flops=conv_flops + 4 * n * cout * length,
            transcendentals=0,
            bytes_accessed=n * cin * length * x_isz + cout * cin * k * w_isz + cout * 2 * 4),
    )(x_ncl, w2d)

    # Tiny per-channel fold (Cout scalars) in plain XLA.
    count = jnp.float32(n * length)
    mean = stats[:, 0] / count
    # E[x^2] - mean^2 in f32; clamp guards cancellation.
    # TODO(synk): centered second pass / Welford merge if conv outputs can have |mean| >> std.
    var = jnp.maximum(stats[:, 1] / count - mean * mean, 0.0)
    inv = lax.rsqrt(var + EPS)
    g32 = gamma.astype(jnp.float32)
    scale = (g32 * inv).reshape(cout, 1)
    shift = (beta.astype(jnp.float32) - mean * g32 * inv).reshape(cout, 1)

    # ---- pass 2: conv (recomputed; x has only Cin rows) -> BN affine -> ReLU, NCL out ----
    per_elem2 = cin * length * x_isz + cout * length * 4 + cout * length * o_isz
    b2 = _pick_batch_block(n, per_elem2, target_bytes=4 << 20,
                           min_grid=2 if n >= 2 else 1)       # >=2 granules for megacore
    params2 = pltpu.CompilerParams(
        dimension_semantics=("parallel",),
        vmem_limit_bytes=_vmem_limit(b2 * per_elem2),
    )
    out = pl.pallas_call(
        functools.partial(_apply_kernel, length=length, k=k, pad_l=pad_l, pad_r=pad_r),
        out_shape=jax.ShapeDtypeStruct((n, cout, length), o_dtype),
        grid=(n // b2,),
        in_specs=[
            pl.BlockSpec((b2, cin, length), lambda i: (i, 0, 0)),
            pl.BlockSpec((cout, cin * k), lambda i: (0, 0)),
            pl.BlockSpec((cout, 1), lambda i: (0, 0)),
            pl.BlockSpec((cout, 1), lambda i: (0, 0)),
        ],
        out_specs=pl.BlockSpec((b2, cout, length), lambda i: (i, 0, 0)),
        compiler_params=params2,
        cost_estimate=pl.CostEstimate(
            flops=conv_flops + 3 * n * cout * length,
            transcendentals=0,
            bytes_accessed=n * cin * length * x_isz + cout * cin * k * w_isz
                           + 2 * cout * 4 + n * cout * length * o_isz),
    )(x_ncl, w2d, scale, shift)
    return out


def reference(x_ncl, weight_oik, gamma, beta):
    """Pure-JAX reference matching PyTorch ConvBlock forward (training-mode BN)."""
    n, cin, length = x_ncl.shape
    cout, _, k = weight_oik.shape
    pad_l = (k - 1) // 2
    pad_r = (k - 1) - pad_l
    x_pad = jnp.pad(x_ncl, ((0, 0), (0, 0), (pad_l, pad_r)))
    xs = jnp.stack([x_pad[:, :, t:t + length] for t in range(k)], axis=-1)  # (N,Cin,L,K)
    conv = jnp.einsum("nclk,ock->nol", xs, weight_oik)
    mean = jnp.mean(conv, axis=(0, 2), keepdims=True)
    var = jnp.mean((conv - mean) ** 2, axis=(0, 2), keepdims=True)  # biased
    y = (conv - mean) / jnp.sqrt(var + EPS)
    y = y * gamma.reshape(1, cout, 1) + beta.reshape(1, cout, 1)
    return jnp.maximum(y, 0.0)


if __name__ == "__main__":
    # ConvBlock(in_channels=3, out_channels=16, kernel_size=3), small shapes.
    N, C_IN, C_OUT, K, L = 2, 3, 16, 3, 16

    key = jax.random.PRNGKey(0)
    kx, kw, kg, kb = jax.random.split(key, 4)
    x = jax.random.normal(kx, (N, C_IN, L), dtype=jnp.float32)
    weight = jax.random.normal(kw, (C_OUT, C_IN, K), dtype=jnp.float32) * 0.1
    gamma = 1.0 + 0.1 * jax.random.normal(kg, (C_OUT,), dtype=jnp.float32)
    beta = 0.1 * jax.random.normal(kb, (C_OUT,), dtype=jnp.float32)

    out = jax.block_until_ready(conv_block(x, weight, gamma, beta, kernel_size=K))
    ref = jax.block_until_ready(reference(x, weight, gamma, beta))

    assert out.shape == (N, C_OUT, L), out.shape
    assert jnp.allclose(out, ref, atol=1e-4, rtol=1e-4), float(jnp.max(jnp.abs(out - ref)))

    print("KERNEL_OK")
</pallas_src>

<mosaic_0001>
module attributes {stable_mosaic.version = 11 : i64} {
  func.func @_stats_kernel(%arg0: i32, %arg1: memref<2x3x16xf32, #tpu.memory_space<vmem>>, %arg2: memref<16x9xf32, #tpu.memory_space<vmem>>, %arg3: memref<16x2xf32, #tpu.memory_space<vmem>>) attributes {dimension_semantics = [#tpu.dimension_semantics<arbitrary>], iteration_bounds = array<i64: 1>, scalar_prefetch = 0 : i64, scratch_operands = 0 : i64, tpu.core_type = #tpu.core_type<tc>, window_params = [{transform_indices = @transform_0, window_bounds = array<i64: 2, 3, 16>}, {pipeline_mode = #tpu.pipeline_mode<synchronous>, transform_indices = @transform_1, window_bounds = array<i64: 16, 9>}, {pipeline_mode = #tpu.pipeline_mode<synchronous>, transform_indices = @transform_2, window_bounds = array<i64: 16, 2>}]} {
    %c0_i32 = arith.constant 0 : i32
    %0 = arith.cmpi eq, %arg0, %c0_i32 : i32
    %1 = arith.extui %0 : i1 to i32
    %c0_i32_0 = arith.constant 0 : i32
    %2 = arith.cmpi ne, %1, %c0_i32_0 : i32
    scf.if %2 {
      %cst_14 = arith.constant 0.000000e+00 : f32
      %81 = vector.broadcast %cst_14 : f32 to vector<16x2xf32>
      %c0_15 = arith.constant 0 : index
      %c0_16 = arith.constant 0 : index
      %82 = vector.load %arg3[%c0_15, %c0_16] : memref<16x2xf32, #tpu.memory_space<vmem>>, vector<16x2xf32>
      tpu.vector_store %arg3[%c0_15, %c0_16], %81 {strides = array<i32>} : memref<16x2xf32, #tpu.memory_space<vmem>>, vector<16x2xf32>,
    } else {
    }
    %c0 = arith.constant 0 : index
    %c0_1 = arith.constant 0 : index
    %c0_2 = arith.constant 0 : index
    %3 = vector.load %arg1[%c0, %c0_1, %c0_2] : memref<2x3x16xf32, #tpu.memory_space<vmem>>, vector<2x3x16xf32>
    %c0_3 = arith.constant 0 : index
    %c0_4 = arith.constant 0 : index
    %4 = vector.load %arg2[%c0_3, %c0_4] : memref<16x9xf32, #tpu.memory_space<vmem>>, vector<16x9xf32>
    %cst = arith.constant 0.000000e+00 : f32
    %5 = vector.broadcast %cst : f32 to vector<2x3x1xf32>
    %cst_5 = arith.constant 0.000000e+00 : f32
    %6 = vector.broadcast %cst_5 : f32 to vector<2x3x1xf32>
    %7 = tpu.concatenate %5, %3, %6 in 2 : vector<2x3x1xf32>, vector<2x3x16xf32>, vector<2x3x1xf32> -> vector<2x3x18xf32>
    %8 = vector.extract_strided_slice %7 {offsets = [0, 0, 0], sizes = [2, 1, 16], strides = [1, 1, 1]} : vector<2x3x18xf32> to vector<2x1x16xf32>
    %9 = vector.extract_strided_slice %4 {offsets = [0, 0], sizes = [16, 1], strides = [1, 1]} : vector<16x9xf32> to vector<16x1xf32>
    %10 = vector.shape_cast %9 : vector<16x1xf32> to vector<1x16x1xf32>
    %11 = vector.broadcast %10 : vector<1x16x1xf32> to vector<2x16x16xf32>
    %12 = vector.broadcast %8 : vector<2x1x16xf32> to vector<2x16x16xf32>
    %13 = arith.mulf %11, %12 : vector<2x16x16xf32>
    %14 = vector.extract_strided_slice %7 {offsets = [0, 0, 1], sizes = [2, 1, 16], strides = [1, 1, 1]} : vector<2x3x18xf32> to vector<2x1x16xf32>
    %15 = vector.extract_strided_slice %4 {offsets = [0, 1], sizes = [16, 1], strides = [1, 1]} : vector<16x9xf32> to vector<16x1xf32>
    %16 = vector.shape_cast %15 : vector<16x1xf32> to vector<1x16x1xf32>
    %17 = vector.broadcast %16 : vector<1x16x1xf32> to vector<2x16x16xf32>
    %18 = vector.broadcast %14 : vector<2x1x16xf32> to vector<2x16x16xf32>
    %19 = arith.mulf %17, %18 : vector<2x16x16xf32>
    %20 = arith.addf %13, %19 : vector<2x16x16xf32>
    %21 = vector.extract_strided_slice %7 {offsets = [0, 0, 2], sizes = [2, 1, 16], strides = [1, 1, 1]} : vector<2x3x18xf32> to vector<2x1x16xf32>
    %22 = vector.extract_strided_slice %4 {offsets = [0, 2], sizes = [16, 1], strides = [1, 1]} : vector<16x9xf32> to vector<16x1xf32>
    %23 = vector.shape_cast %22 : vector<16x1xf32> to vector<1x16x1xf32>
    %24 = vector.broadcast %23 : vector<1x16x1xf32> to vector<2x16x16xf32>
    %25 = vector.broadcast %21 : vector<2x1x16xf32> to vector<2x16x16xf32>
    %26 = arith.mulf %24, %25 : vector<2x16x16xf32>
    %27 = arith.addf %20, %26 : vector<2x16x16xf32>
    %28 = vector.extract_strided_slice %7 {offsets = [0, 1, 0], sizes = [2, 1, 16], strides = [1, 1, 1]} : vector<2x3x18xf32> to vector<2x1x16xf32>
    %29 = vector.extract_strided_slice %4 {offsets = [0, 3], sizes = [16, 1], strides = [1, 1]} : vector<16x9xf32> to vector<16x1xf32>
    %30 = vector.shape_cast %29 : vector<16x1xf32> to vector<1x16x1xf32>
    %31 = vector.broadcast %30 : vector<1x16x1xf32> to vector<2x16x16xf32>
    %32 = vector.broadcast %28 : vector<2x1x16xf32> to vector<2x16x16xf32>
    %33 = arith.mulf %31, %32 : vector<2x16x16xf32>
    %34 = arith.addf %27, %33 : vector<2x16x16xf32>
    %35 = vector.extract_strided_slice %7 {offsets = [0, 1, 1], sizes = [2, 1, 16], strides = [1, 1, 1]} : vector<2x3x18xf32> to vector<2x1x16xf32>
    %36 = vector.extract_strided_slice %4 {offsets = [0, 4], sizes = [16, 1], strides = [1, 1]} : vector<16x9xf32> to vector<16x1xf32>
    %37 = vector.shape_cast %36 : vector<16x1xf32> to vector<1x16x1xf32>
    %38 = vector.broadcast %37 : vector<1x16x1xf32> to vector<2x16x16xf32>
    %39 = vector.broadcast %35 : vector<2x1x16xf32> to vector<2x16x16xf32>
    %40 = arith.mulf %38, %39 : vector<2x16x16xf32>
    %41 = arith.addf %34, %40 : vector<2x16x16xf32>
    %42 = vector.extract_strided_slice %7 {offsets = [0, 1, 2], sizes = [2, 1, 16], strides = [1, 1, 1]} : vector<2x3x18xf32> to vector<2x1x16xf32>
    %43 = vector.extract_strided_slice %4 {offsets = [0, 5], sizes = [16, 1], strides = [1, 1]} : vector<16x9xf32> to vector<16x1xf32>
    %44 = vector.shape_cast %43 : vector<16x1xf32> to vector<1x16x1xf32>
    %45 = vector.broadcast %44 : vector<1x16x1xf32> to vector<2x16x16xf32>
    %46 = vector.broadcast %42 : vector<2x1x16xf32> to vector<2x16x16xf32>
    %47 = arith.mulf %45, %46 : vector<2x16x16xf32>
    %48 = arith.addf %41, %47 : vector<2x16x16xf32>
    %49 = vector.extract_strided_slice %7 {offsets = [0, 2, 0], sizes = [2, 1, 16], strides = [1, 1, 1]} : vector<2x3x18xf32> to vector<2x1x16xf32>
    %50 = vector.extract_strided_slice %4 {offsets = [0, 6], sizes = [16, 1], strides = [1, 1]} : vector<16x9xf32> to vector<16x1xf32>
    %51 = vector.shape_cast %50 : vector<16x1xf32> to vector<1x16x1xf32>
    %52 = vector.broadcast %51 : vector<1x16x1xf32> to vector<2x16x16xf32>
    %53 = vector.broadcast %49 : vector<2x1x16xf32> to vector<2x16x16xf32>
    %54 = arith.mulf %52, %53 : vector<2x16x16xf32>
    %55 = arith.addf %48, %54 : vector<2x16x16xf32>
    %56 = vector.extract_strided_slice %7 {offsets = [0, 2, 1], sizes = [2, 1, 16], strides = [1, 1, 1]} : vector<2x3x18xf32> to vector<2x1x16xf32>
    %57 = vector.extract_strided_slice %4 {offsets = [0, 7], sizes = [16, 1], strides = [1, 1]} : vector<16x9xf32> to vector<16x1xf32>
    %58 = vector.shape_cast %57 : vector<16x1xf32> to vector<1x16x1xf32>
    %59 = vector.broadcast %58 : vector<1x16x1xf32> to vector<2x16x16xf32>
    %60 = vector.broadcast %56 : vector<2x1x16xf32> to vector<2x16x16xf32>
    %61 = arith.mulf %59, %60 : vector<2x16x16xf32>
    %62 = arith.addf %55, %61 : vector<2x16x16xf32>
    %63 = vector.extract_strided_slice %7 {offsets = [0, 2, 2], sizes = [2, 1, 16], strides = [1, 1, 1]} : vector<2x3x18xf32> to vector<2x1x16xf32>
    %64 = vector.extract_strided_slice %4 {offsets = [0, 8], sizes = [16, 1], strides = [1, 1]} : vector<16x9xf32> to vector<16x1xf32>
    %65 = vector.shape_cast %64 : vector<16x1xf32> to vector<1x16x1xf32>
    %66 = vector.broadcast %65 : vector<1x16x1xf32> to vector<2x16x16xf32>
    %67 = vector.broadcast %63 : vector<2x1x16xf32> to vector<2x16x16xf32>
    %68 = arith.mulf %66, %67 : vector<2x16x16xf32>
    %69 = arith.addf %62, %68 : vector<2x16x16xf32>
    %cst_6 = arith.constant dense<0.000000e+00> : vector<16x16xf32>
    %70 = vector.multi_reduction <add>, %69, %cst_6 [0] : vector<2x16x16xf32> to vector<16x16xf32>
    %71 = arith.mulf %69, %69 : vector<2x16x16xf32>
    %cst_7 = arith.constant dense<0.000000e+00> : vector<16x16xf32>
    %72 = vector.multi_reduction <add>, %71, %cst_7 [0] : vector<2x16x16xf32> to vector<16x16xf32>
    %cst_8 = arith.constant dense<0.000000e+00> : vector<16xf32>
    %73 = vector.multi_reduction <add>, %70, %cst_8 [1] : vector<16x16xf32> to vector<16xf32>
    %74 = vector.shape_cast %73 : vector<16xf32> to vector<16x1xf32>
    %cst_9 = arith.constant dense<0.000000e+00> : vector<16xf32>
    %75 = vector.multi_reduction <add>, %72, %cst_9 [1] : vector<16x16xf32> to vector<16xf32>
    %76 = vector.shape_cast %75 : vector<16xf32> to vector<16x1xf32>
    %c0_10 = arith.constant 0 : index
    %c0_11 = arith.constant 0 : index
    %77 = vector.load %arg3[%c0_10, %c0_11] : memref<16x2xf32, #tpu.memory_space<vmem>>, vector<16x2xf32>
    %78 = tpu.concatenate %74, %76 in 1 : vector<16x1xf32>, vector<16x1xf32> -> vector<16x2xf32>
    %79 = arith.addf %77, %78 : vector<16x2xf32>
    %c0_12 = arith.constant 0 : index
    %c0_13 = arith.constant 0 : index
    %80 = vector.load %arg3[%c0_12, %c0_13] : memref<16x2xf32, #tpu.memory_space<vmem>>, vector<16x2xf32>
    tpu.vector_store %arg3[%c0_12, %c0_13], %79 {strides = array<i32>} : memref<16x2xf32, #tpu.memory_space<vmem>>, vector<16x2xf32>,
    return
  }
  func.func @transform_0(%arg0: i32) -> (i32, i32, i32) {
    %c0_i32 = arith.constant 0 : i32
    %c0_i32_0 = arith.constant 0 : i32
    %c0_i32_1 = arith.constant 0 : i32
    return %arg0, %c0_i32, %c0_i32_0 : i32, i32, i32
  }
  func.func @transform_1(%arg0: i32) -> (i32, i32) {
    %c0_i32 = arith.constant 0 : i32
    %c0_i32_0 = arith.constant 0 : i32
    %c0_i32_1 = arith.constant 0 : i32
    return %c0_i32, %c0_i32_0 : i32, i32
  }
  func.func @transform_2(%arg0: i32) -> (i32, i32) {
    %c0_i32 = arith.constant 0 : i32
    %c0_i32_0 = arith.constant 0 : i32
    %c0_i32_1 = arith.constant 0 : i32
    return %c0_i32, %c0_i32_0 : i32, i32
  }
}

module attributes {stable_mosaic.version = 11 : i64} {
  func.func @_apply_kernel(%arg0: i32, %arg1: memref<1x3x16xf32, #tpu.memory_space<vmem>>, %arg2: memref<16x9xf32, #tpu.memory_space<vmem>>, %arg3: memref<16x1xf32, #tpu.memory_space<vmem>>, %arg4: memref<16x1xf32, #tpu.memory_space<vmem>>, %arg5: memref<1x16x16xf32, #tpu.memory_space<vmem>>) attributes {dimension_semantics = [#tpu.dimension_semantics<parallel>], iteration_bounds = array<i64: 2>, scalar_prefetch = 0 : i64, scratch_operands = 0 : i64, tpu.core_type = #tpu.core_type<tc>, window_params = [{transform_indices = @transform_0, window_bounds = array<i64: 1, 3, 16>}, {pipeline_mode = #tpu.pipeline_mode<synchronous>, transform_indices = @transform_1, window_bounds = array<i64: 16, 9>}, {pipeline_mode = #tpu.pipeline_mode<synchronous>, transform_indices = @transform_2, window_bounds = array<i64: 16, 1>}, {pipeline_mode = #tpu.pipeline_mode<synchronous>, transform_indices = @transform_3, window_bounds = array<i64: 16, 1>}, {transform_indices = @transform_4, window_bounds = array<i64: 1, 16, 16>}]} {
    %c0 = arith.constant 0 : index
    %c0_0 = arith.constant 0 : index
    %c0_1 = arith.constant 0 : index
    %0 = vector.load %arg1[%c0, %c0_0, %c0_1] : memref<1x3x16xf32, #tpu.memory_space<vmem>>, vector<1x3x16xf32>
    %c0_2 = arith.constant 0 : index
    %c0_3 = arith.constant 0 : index
    %1 = vector.load %arg2[%c0_2, %c0_3] : memref<16x9xf32, #tpu.memory_space<vmem>>, vector<16x9xf32>
    %cst = arith.constant 0.000000e+00 : f32
    %2 = vector.broadcast %cst : f32 to vector<1x3x1xf32>
    %cst_4 = arith.constant 0.000000e+00 : f32
    %3 = vector.broadcast %cst_4 : f32 to vector<1x3x1xf32>
    %4 = tpu.concatenate %2, %0, %3 in 2 : vector<1x3x1xf32>, vector<1x3x16xf32>, vector<1x3x1xf32> -> vector<1x3x18xf32>
    %5 = vector.extract_strided_slice %4 {offsets = [0, 0, 0], sizes = [1, 1, 16], strides = [1, 1, 1]} : vector<1x3x18xf32> to vector<1x1x16xf32>
    %6 = vector.extract_strided_slice %1 {offsets = [0, 0], sizes = [16, 1], strides = [1, 1]} : vector<16x9xf32> to vector<16x1xf32>
    %7 = vector.shape_cast %6 : vector<16x1xf32> to vector<1x16x1xf32>
    %8 = vector.broadcast %7 : vector<1x16x1xf32> to vector<1x16x16xf32>
    %9 = vector.broadcast %5 : vector<1x1x16xf32> to vector<1x16x16xf32>
    %10 = arith.mulf %8, %9 : vector<1x16x16xf32>
    %11 = vector.extract_strided_slice %4 {offsets = [0, 0, 1], sizes = [1, 1, 16], strides = [1, 1, 1]} : vector<1x3x18xf32> to vector<1x1x16xf32>
    %12 = vector.extract_strided_slice %1 {offsets = [0, 1], sizes = [16, 1], strides = [1, 1]} : vector<16x9xf32> to vector<16x1xf32>
    %13 = vector.shape_cast %12 : vector<16x1xf32> to vector<1x16x1xf32>
    %14 = vector.broadcast %13 : vector<1x16x1xf32> to vector<1x16x16xf32>
    %15 = vector.broadcast %11 : vector<1x1x16xf32> to vector<1x16x16xf32>
    %16 = arith.mulf %14, %15 : vector<1x16x16xf32>
    %17 = arith.addf %10, %16 : vector<1x16x16xf32>
    %18 = vector.extract_strided_slice %4 {offsets = [0, 0, 2], sizes = [1, 1, 16], strides = [1, 1, 1]} : vector<1x3x18xf32> to vector<1x1x16xf32>
    %19 = vector.extract_strided_slice %1 {offsets = [0, 2], sizes = [16, 1], strides = [1, 1]} : vector<16x9xf32> to vector<16x1xf32>
    %20 = vector.shape_cast %19 : vector<16x1xf32> to vector<1x16x1xf32>
    %21 = vector.broadcast %20 : vector<1x16x1xf32> to vector<1x16x16xf32>
    %22 = vector.broadcast %18 : vector<1x1x16xf32> to vector<1x16x16xf32>
    %23 = arith.mulf %21, %22 : vector<1x16x16xf32>
    %24 = arith.addf %17, %23 : vector<1x16x16xf32>
    %25 = vector.extract_strided_slice %4 {offsets = [0, 1, 0], sizes = [1, 1, 16], strides = [1, 1, 1]} : vector<1x3x18xf32> to vector<1x1x16xf32>
    %26 = vector.extract_strided_slice %1 {offsets = [0, 3], sizes = [16, 1], strides = [1, 1]} : vector<16x9xf32> to vector<16x1xf32>
    %27 = vector.shape_cast %26 : vector<16x1xf32> to vector<1x16x1xf32>
    %28 = vector.broadcast %27 : vector<1x16x1xf32> to vector<1x16x16xf32>
    %29 = vector.broadcast %25 : vector<1x1x16xf32> to vector<1x16x16xf32>
    %30 = arith.mulf %28, %29 : vector<1x16x16xf32>
    %31 = arith.addf %24, %30 : vector<1x16x16xf32>
    %32 = vector.extract_strided_slice %4 {offsets = [0, 1, 1], sizes = [1, 1, 16], strides = [1, 1, 1]} : vector<1x3x18xf32> to vector<1x1x16xf32>
    %33 = vector.extract_strided_slice %1 {offsets = [0, 4], sizes = [16, 1], strides = [1, 1]} : vector<16x9xf32> to vector<16x1xf32>
    %34 = vector.shape_cast %33 : vector<16x1xf32> to vector<1x16x1xf32>
    %35 = vector.broadcast %34 : vector<1x16x1xf32> to vector<1x16x16xf32>
    %36 = vector.broadcast %32 : vector<1x1x16xf32> to vector<1x16x16xf32>
    %37 = arith.mulf %35, %36 : vector<1x16x16xf32>
    %38 = arith.addf %31, %37 : vector<1x16x16xf32>
    %39 = vector.extract_strided_slice %4 {offsets = [0, 1, 2], sizes = [1, 1, 16], strides = [1, 1, 1]} : vector<1x3x18xf32> to vector<1x1x16xf32>
    %40 = vector.extract_strided_slice %1 {offsets = [0, 5], sizes = [16, 1], strides = [1, 1]} : vector<16x9xf32> to vector<16x1xf32>
    %41 = vector.shape_cast %40 : vector<16x1xf32> to vector<1x16x1xf32>
    %42 = vector.broadcast %41 : vector<1x16x1xf32> to vector<1x16x16xf32>
    %43 = vector.broadcast %39 : vector<1x1x16xf32> to vector<1x16x16xf32>
    %44 = arith.mulf %42, %43 : vector<1x16x16xf32>
    %45 = arith.addf %38, %44 : vector<1x16x16xf32>
    %46 = vector.extract_strided_slice %4 {offsets = [0, 2, 0], sizes = [1, 1, 16], strides = [1, 1, 1]} : vector<1x3x18xf32> to vector<1x1x16xf32>
    %47 = vector.extract_strided_slice %1 {offsets = [0, 6], sizes = [16, 1], strides = [1, 1]} : vector<16x9xf32> to vector<16x1xf32>
    %48 = vector.shape_cast %47 : vector<16x1xf32> to vector<1x16x1xf32>
    %49 = vector.broadcast %48 : vector<1x16x1xf32> to vector<1x16x16xf32>
    %50 = vector.broadcast %46 : vector<1x1x16xf32> to vector<1x16x16xf32>
    %51 = arith.mulf %49, %50 : vector<1x16x16xf32>
    %52 = arith.addf %45, %51 : vector<1x16x16xf32>
    %53 = vector.extract_strided_slice %4 {offsets = [0, 2, 1], sizes = [1, 1, 16], strides = [1, 1, 1]} : vector<1x3x18xf32> to vector<1x1x16xf32>
    %54 = vector.extract_strided_slice %1 {offsets = [0, 7], sizes = [16, 1], strides = [1, 1]} : vector<16x9xf32> to vector<16x1xf32>
    %55 = vector.shape_cast %54 : vector<16x1xf32> to vector<1x16x1xf32>
    %56 = vector.broadcast %55 : vector<1x16x1xf32> to vector<1x16x16xf32>
    %57 = vector.broadcast %53 : vector<1x1x16xf32> to vector<1x16x16xf32>
    %58 = arith.mulf %56, %57 : vector<1x16x16xf32>
    %59 = arith.addf %52, %58 : vector<1x16x16xf32>
    %60 = vector.extract_strided_slice %4 {offsets = [0, 2, 2], sizes = [1, 1, 16], strides = [1, 1, 1]} : vector<1x3x18xf32> to vector<1x1x16xf32>
    %61 = vector.extract_strided_slice %1 {offsets = [0, 8], sizes = [16, 1], strides = [1, 1]} : vector<16x9xf32> to vector<16x1xf32>
    %62 = vector.shape_cast %61 : vector<16x1xf32> to vector<1x16x1xf32>
    %63 = vector.broadcast %62 : vector<1x16x1xf32> to vector<1x16x16xf32>
    %64 = vector.broadcast %60 : vector<1x1x16xf32> to vector<1x16x16xf32>
    %65 = arith.mulf %63, %64 : vector<1x16x16xf32>
    %66 = arith.addf %59, %65 : vector<1x16x16xf32>
    %c0_5 = arith.constant 0 : index
    %c0_6 = arith.constant 0 : index
    %67 = vector.load %arg3[%c0_5, %c0_6] : memref<16x1xf32, #tpu.memory_space<vmem>>, vector<16x1xf32>
    %68 = vector.shape_cast %67 : vector<16x1xf32> to vector<1x16x1xf32>
    %69 = vector.broadcast %68 : vector<1x16x1xf32> to vector<1x16x16xf32>
    %70 = arith.mulf %66, %69 : vector<1x16x16xf32>
    %c0_7 = arith.constant 0 : index
    %c0_8 = arith.constant 0 : index
    %71 = vector.load %arg4[%c0_7, %c0_8] : memref<16x1xf32, #tpu.memory_space<vmem>>, vector<16x1xf32>
    %72 = vector.shape_cast %71 : vector<16x1xf32> to vector<1x16x1xf32>
    %73 = vector.broadcast %72 : vector<1x16x1xf32> to vector<1x16x16xf32>
    %74 = arith.addf %70, %73 : vector<1x16x16xf32>
    %cst_9 = arith.constant 0.000000e+00 : f32
    %75 = vector.broadcast %cst_9 : f32 to vector<1x16x16xf32>
    %76 = arith.maximumf %74, %75 : vector<1x16x16xf32>
    %c0_10 = arith.constant 0 : index
    %c0_11 = arith.constant 0 : index
    %c0_12 = arith.constant 0 : index
    %77 = vector.load %arg5[%c0_10, %c0_11, %c0_12] : memref<1x16x16xf32, #tpu.memory_space<vmem>>, vector<1x16x16xf32>
    tpu.vector_store %arg5[%c0_10, %c0_11, %c0_12], %76 {strides = array<i32>} : memref<1x16x16xf32, #tpu.memory_space<vmem>>, vector<1x16x16xf32>,
    return
  }
  func.func @transform_0(%arg0: i32) -> (i32, i32, i32) {
    %c0_i32 = arith.constant 0 : i32
    %c0_i32_0 = arith.constant 0 : i32
    %c0_i32_1 = arith.constant 0 : i32
    return %arg0, %c0_i32, %c0_i32_0 : i32, i32, i32
  }
  func.func @transform_1(%arg0: i32) -> (i32, i32) {
    %c0_i32 = arith.constant 0 : i32
    %c0_i32_0 = arith.constant 0 : i32
    %c0_i32_1 = arith.constant 0 : i32
    return %c0_i32, %c0_i32_0 : i32, i32
  }
  func.func @transform_2(%arg0: i32) -> (i32, i32) {
    %c0_i32 = arith.constant 0 : i32
    %c0_i32_0 = arith.constant 0 : i32
    %c0_i32_1 = arith.constant 0 : i32
    return %c0_i32, %c0_i32_0 : i32, i32
  }
  func.func @transform_3(%arg0: i32) -> (i32, i32) {
    %c0_i32 = arith.constant 0 : i32
    %c0_i32_0 = arith.constant 0 : i32
    %c0_i32_1 = arith.constant 0 : i32
    return %c0_i32, %c0_i32_0 : i32, i32
  }
  func.func @transform_4(%arg0: i32) -> (i32, i32, i32) {
    %c0_i32 = arith.constant 0 : i32
    %c0_i32_0 = arith.constant 0 : i32
    %c0_i32_1 = arith.constant 0 : i32
    return %arg0, %c0_i32, %c0_i32_0 : i32, i32, i32
  }
}

</mosaic_0001>

<llo_original>
// kernel: conv_block.2
$region0: #{conv_block.2}
  #allocation0 [shape = 'u32[]', space=smem, size = 0x4, offset = 0x4, fixed_abs, tag = 'smem constant byte address 0x4 - core index']
  #allocation1 [shape = 'u32[144,128]{1,0:T(1,128)}', space=vmem, size = 0x12000, scoped, tag = 'internal scratch']
  %s0 = inlined_call_operand.vmem [shape: f32[2,3,16], index: 0, kind: input, shape index: {}]
  %s1 = inlined_call_operand.vmem [shape: f32[16,9], index: 1, kind: input, shape index: {}]
  %s2 = inlined_call_operand.vmem [shape: f32[16,2], index: 2, kind: output, shape index: {}]
  %s3 = sld [smem:[#allocation0]]
  $region22: #{conv_block.2} parent=0
    _
  %s5 = ssub.s32 1, %s3
  %s6 = scalar_select 0, %s5, %s3
  // Predicated region
  $region2: #{conv_block.2} parent=0 // pred_check
    _
  $region3: #{conv_block.2} parent=0 // pred_check_branch
    %8 = sbr.rel (0) target = $region5
  $region4: #{conv_block.2} parent=0 // pred_region
    _
  $region5: #{conv_block.2} parent=0 // pred_fallthru
    _
  // Predicated region
  $region6: #{conv_block.2} parent=0 // pred_check
    _
  $region7: #{conv_block.2} parent=0 // pred_check_branch
    %10 = sbr.rel (0) target = $region9
  $region8: #{conv_block.2} parent=0 // pred_region
    _
  $region9: #{conv_block.2} parent=0 // pred_fallthru
    _
  %p11 = scmp.eq.s32.totalorder 0, 0
  // Predicated region
  $region10: #{conv_block.2} parent=0 // pred_check
    %p12 = pneg %p11
  $region11: #{conv_block.2} parent=0 // pred_check_branch
    %14 = sbr.rel (%p12) target = $region13
  $region12: #{conv_block.2} parent=0 // pred_region
    %vm15 = vcmask 15360
    %16 = vst.msk [vmem:[%s2] sm:$0xff] %vm15, 0.0
    %17 = vst.msk [vmem:[%s2 + $0x8] sm:$0xff] %vm15, 0.0
  $region13: #{conv_block.2} parent=0 // pred_fallthru
    _
  %v18 = vld [vmem:[%s0] sm:$0x7]
  %v19 = vld [vmem:[%s0 + $0x4] sm:$0x7]
  %v20 = vld [vmem:[%s1] sm:$0xff]
  %v21 = vld [vmem:[%s1 + $0x8] sm:$0xff]
  %24 = vrot.lane.b32.xlu0 %v18, 1
  %v25 = vpop.permute.xlu0 %24
  %26 = vrot.lane.b32.xlu0 %v19, 1
  %v27 = vpop.permute.xlu0 %26
  %vm30 = vcmask 7168
  %v31 = vsel %vm30, 0.0, %v25
  %v32 = vsel %vm30, 0.0, %v27
  %vm33 = vcmask 138240
  %v34 = vsel %vm33, %v31, 0.0
  %v35 = vsel %vm33, %v32, 0.0
  %37 = vset.pattern.permute.xlu0 0
  %38 = vperm.xlu0 %37, %v20
  %v39 = vpop.permute.xlu0 %38
  %42 = vset.pattern.permute.xlu0 0
  %43 = vperm.xlu0 %42, %v21
  %v44 = vpop.permute.xlu0 %43
  %v46 = vlaneseq
  %v47 = vshrl.u32 %v46, 7
  %v48 = vsub.s32 0, %v47
  %v49 = vrot.slane %v34, %v48
  %v50 = vlaneseq
  %v51 = vshrl.u32 %v50, 7
  %v52 = vsub.s32 0, %v51
  %v53 = vrot.slane %v35, %v52
  %v54 = vmul.f32 %v39, %v49
  %v55 = vmul.f32 %v44, %v49
  %v56 = vmul.f32 %v39, %v53
  %v57 = vmul.f32 %v44, %v53
  %58 = vset.pattern.permute.xlu0 1
  %59 = vperm.xlu0 %58, %v20
  %v60 = vpop.permute.xlu0 %59
  %62 = vset.pattern.permute.xlu0 1
  %63 = vperm.xlu0 %62, %v21
  %v64 = vpop.permute.xlu0 %63
  %v66 = vmul.f32 %v60, %v49
  %v67 = vmul.f32 %v64, %v49
  %v68 = vmul.f32 %v60, %v53
  %v69 = vmul.f32 %v64, %v53
  %74 = vrot.lane.b32.xlu0 %v66, 127
  %v75 = vpop.permute.xlu0 %74
  %76 = vrot.lane.b32.xlu0 %v67, 127
  %v77 = vpop.permute.xlu0 %76
  %78 = vrot.lane.b32.xlu0 %v68, 127
  %v79 = vpop.permute.xlu0 %78
  %80 = vrot.lane.b32.xlu0 %v69, 127
  %v81 = vpop.permute.xlu0 %80
  %v86 = vadd.f32 %v54, %v75
  %v87 = vadd.f32 %v55, %v77
  %v88 = vadd.f32 %v56, %v79
  %v89 = vadd.f32 %v57, %v81
  %90 = vset.pattern.permute.xlu0 2
  %91 = vperm.xlu0 %90, %v20
  %v92 = vpop.permute.xlu0 %91
  %94 = vset.pattern.permute.xlu0 2
  %95 = vperm.xlu0 %94, %v21
  %v96 = vpop.permute.xlu0 %95
  %v98 = vmul.f32 %v92, %v49
  %v99 = vmul.f32 %v96, %v49
  %v100 = vmul.f32 %v92, %v53
  %v101 = vmul.f32 %v96, %v53
  %106 = vrot.lane.b32.xlu0 %v98, 126
  %v107 = vpop.permute.xlu0 %106
  %108 = vrot.lane.b32.xlu0 %v99, 126
  %v109 = vpop.permute.xlu0 %108
  %110 = vrot.lane.b32.xlu0 %v100, 126
  %v111 = vpop.permute.xlu0 %110
  %112 = vrot.lane.b32.xlu0 %v101, 126
  %v113 = vpop.permute.xlu0 %112
  %v118 = vadd.f32 %v86, %v107
  %v119 = vadd.f32 %v87, %v109
  %v120 = vadd.f32 %v88, %v111
  %v121 = vadd.f32 %v89, %v113
  %122 = vset.pattern.permute.xlu0 3
  %123 = vperm.xlu0 %122, %v20
  %v124 = vpop.permute.xlu0 %123
  %126 = vset.pattern.permute.xlu0 3
  %127 = vperm.xlu0 %126, %v21
  %v128 = vpop.permute.xlu0 %127
  %v130 = vlaneseq
  %v131 = vshrl.u32 %v130, 7
  %v132 = vsub.s32 1, %v131
  %v133 = vrot.slane %v34, %v132
  %v134 = vlaneseq
  %v135 = vshrl.u32 %v134, 7
  %v136 = vsub.s32 1, %v135
  %v137 = vrot.slane %v35, %v136
  %v138 = vmul.f32 %v124, %v133
  %v139 = vmul.f32 %v128, %v133
  %v140 = vmul.f32 %v124, %v137
  %v141 = vmul.f32 %v128, %v137
  %v142 = vadd.f32 %v118, %v138
  %v143 = vadd.f32 %v119, %v139
  %v144 = vadd.f32 %v120, %v140
  %v145 = vadd.f32 %v121, %v141
  %146 = vset.pattern.permute.xlu0 4
  %147 = vperm.xlu0 %146, %v20
  %v148 = vpop.permute.xlu0 %147
  %150 = vset.pattern.permute.xlu0 4
  %151 = vperm.xlu0 %150, %v21
  %v152 = vpop.permute.xlu0 %151
  %v154 = vmul.f32 %v148, %v133
  %v155 = vmul.f32 %v152, %v133
  %v156 = vmul.f32 %v148, %v137
  %v157 = vmul.f32 %v152, %v137
  %162 = vrot.lane.b32.xlu0 %v154, 127
  %v163 = vpop.permute.xlu0 %162
  %164 = vrot.lane.b32.xlu0 %v155, 127
  %v165 = vpop.permute.xlu0 %164
  %166 = vrot.lane.b32.xlu0 %v156, 127
  %v167 = vpop.permute.xlu0 %166
  %168 = vrot.lane.b32.xlu0 %v157, 127
  %v169 = vpop.permute.xlu0 %168
  %v174 = vadd.f32 %v142, %v163
  %v175 = vadd.f32 %v143, %v165
  %v176 = vadd.f32 %v144, %v167
  %v177 = vadd.f32 %v145, %v169
  %178 = vset.pattern.permute.xlu0 5
  %179 = vperm.xlu0 %178, %v20
  %v180 = vpop.permute.xlu0 %179
  %182 = vset.pattern.permute.xlu0 5
  %183 = vperm.xlu0 %182, %v21
  %v184 = vpop.permute.xlu0 %183
  %v186 = vmul.f32 %v180, %v133
  %v187 = vmul.f32 %v184, %v133
  %v188 = vmul.f32 %v180, %v137
  %v189 = vmul.f32 %v184, %v137
  %194 = vrot.lane.b32.xlu0 %v186, 126
  %v195 = vpop.permute.xlu0 %194
  %196 = vrot.lane.b32.xlu0 %v187, 126
  %v197 = vpop.permute.xlu0 %196
  %198 = vrot.lane.b32.xlu0 %v188, 126
  %v199 = vpop.permute.xlu0 %198
  %200 = vrot.lane.b32.xlu0 %v189, 126
  %v201 = vpop.permute.xlu0 %200
  %v206 = vadd.f32 %v174, %v195
  %v207 = vadd.f32 %v175, %v197
  %v208 = vadd.f32 %v176, %v199
  %v209 = vadd.f32 %v177, %v201
  %210 = vset.pattern.permute.xlu0 6
  %211 = vperm.xlu0 %210, %v20
  %v212 = vpop.permute.xlu0 %211
  %214 = vset.pattern.permute.xlu0 6
  %215 = vperm.xlu0 %214, %v21
  %v216 = vpop.permute.xlu0 %215
  %v218 = vlaneseq
  %v219 = vshrl.u32 %v218, 7
  %v220 = vsub.s32 2, %v219
  %v221 = vrot.slane %v34, %v220
  %v222 = vlaneseq
  %v223 = vshrl.u32 %v222, 7
  %v224 = vsub.s32 2, %v223
  %v225 = vrot.slane %v35, %v224
  %v226 = vmul.f32 %v212, %v221
  %v227 = vmul.f32 %v216, %v221
  %v228 = vmul.f32 %v212, %v225
  %v229 = vmul.f32 %v216, %v225
  %v230 = vadd.f32 %v206, %v226
  %v231 = vadd.f32 %v207, %v227
  %v232 = vadd.f32 %v208, %v228
  %v233 = vadd.f32 %v209, %v229
  %234 = vset.pattern.permute.xlu0 7
  %235 = vperm.xlu0 %234, %v20
  %v236 = vpop.permute.xlu0 %235
  %238 = vset.pattern.permute.xlu0 7
  %239 = vperm.xlu0 %238, %v21
  %v240 = vpop.permute.xlu0 %239
  %v242 = vmul.f32 %v236, %v221
  %v243 = vmul.f32 %v240, %v221
  %v244 = vmul.f32 %v236, %v225
  %v245 = vmul.f32 %v240, %v225
  %250 = vrot.lane.b32.xlu0 %v242, 127
  %v251 = vpop.permute.xlu0 %250
  %252 = vrot.lane.b32.xlu0 %v243, 127
  %v253 = vpop.permute.xlu0 %252
  %254 = vrot.lane.b32.xlu0 %v244, 127
  %v255 = vpop.permute.xlu0 %254
  %256 = vrot.lane.b32.xlu0 %v245, 127
  %v257 = vpop.permute.xlu0 %256
  %v262 = vadd.f32 %v230, %v251
  %v263 = vadd.f32 %v231, %v253
  %v264 = vadd.f32 %v232, %v255
  %v265 = vadd.f32 %v233, %v257
  %266 = vset.pattern.permute.xlu0 8
  %267 = vperm.xlu0 %266, %v20
  %v268 = vpop.permute.xlu0 %267
  %270 = vset.pattern.permute.xlu0 8
  %271 = vperm.xlu0 %270, %v21
  %v272 = vpop.permute.xlu0 %271
  %v274 = vmul.f32 %v268, %v221
  %v275 = vmul.f32 %v272, %v221
  %v276 = vmul.f32 %v268, %v225
  %v277 = vmul.f32 %v272, %v225
  %282 = vrot.lane.b32.xlu0 %v274, 126
  %v283 = vpop.permute.xlu0 %282
  %284 = vrot.lane.b32.xlu0 %v275, 126
  %v285 = vpop.permute.xlu0 %284
  %286 = vrot.lane.b32.xlu0 %v276, 126
  %v287 = vpop.permute.xlu0 %286
  %288 = vrot.lane.b32.xlu0 %v277, 126
  %v289 = vpop.permute.xlu0 %288
  %v294 = vadd.f32 %v262, %v283
  %v295 = vadd.f32 %v263, %v285
  %v296 = vadd.f32 %v264, %v287
  %v297 = vadd.f32 %v265, %v289
  %vm298 = vcmask 130048
  %v299 = vsel %vm298, %v294, 0.0
  %v300 = vsel %vm298, %v296, 0.0
  %v301 = vadd.f32 %v299, %v300
  %v302 = vsel %vm298, %v295, 0.0
  %v303 = vsel %vm298, %v297, 0.0
  %v304 = vadd.f32 %v302, %v303
  %v305 = vmul.f32 %v294, %v294
  %v306 = vmul.f32 %v295, %v295
  %v307 = vmul.f32 %v296, %v296
  %v308 = vmul.f32 %v297, %v297
  %v309 = vsel %vm298, %v305, 0.0
  %v310 = vsel %vm298, %v307, 0.0
  %v311 = vadd.f32 %v309, %v310
  %v312 = vsel %vm298, %v306, 0.0
  %v313 = vsel %vm298, %v308, 0.0
  %v314 = vadd.f32 %v312, %v313
  %v315 = vsel %vm298, %v301, 0.0
  %316 = vadd.xlane.f32.xlu0 %v315
  %v317 = vpop.xlane.xlu0 %316
  %v318 = vsel %vm298, %v304, 0.0
  %319 = vadd.xlane.f32.xlu0 %v318
  %v320 = vpop.xlane.xlu0 %319
  %v321 = vsel %vm298, %v311, 0.0
  %322 = vadd.xlane.f32.xlu0 %v321
  %v323 = vpop.xlane.xlu0 %322
  %v324 = vsel %vm298, %v314, 0.0
  %325 = vadd.xlane.f32.xlu0 %v324
  %v326 = vpop.xlane.xlu0 %325
  %v327 = vld [vmem:[%s2] sm:$0xff]
  %v328 = vld [vmem:[%s2 + $0x8] sm:$0xff]
  %v329 = vsel %vm30, %v317, %v323
  %v330 = vsel %vm30, %v320, %v326
  %v331 = vadd.f32 %v327, %v329
  %v332 = vadd.f32 %v328, %v330
  %vm333 = vcmask 15360
  %334 = vst.msk [vmem:[%s2] sm:$0xff] %vm333, %v331
  %335 = vst.msk [vmem:[%s2 + $0x8] sm:$0xff] %vm333, %v332
  // Predicated region
  $region14: #{conv_block.2} parent=0 // pred_check
    _
  $region15: #{conv_block.2} parent=0 // pred_check_branch
    %337 = sbr.rel (0) target = $region17
  $region16: #{conv_block.2} parent=0 // pred_region
    _
  $region17: #{conv_block.2} parent=0 // pred_fallthru
    _
  // Predicated region
  $region18: #{conv_block.2} parent=0 // pred_check
    _
  $region19: #{conv_block.2} parent=0 // pred_check_branch
    %339 = sbr.rel (0) target = $region21
  $region20: #{conv_block.2} parent=0 // pred_region
    _
  $region21: #{conv_block.2} parent=0 // pred_fallthru
    _

// kernel: conv_block.3
$region0: #{conv_block.3}
  #allocation0 [shape = 'u32[]', space=smem, size = 0x4, offset = 0x4, fixed_abs, tag = 'smem constant byte address 0x4 - core index']
  #allocation1 [shape = 'u32[144,128]{1,0:T(1,128)}', space=vmem, size = 0x12000, scoped, tag = 'internal scratch']
  %s0 = inlined_call_operand.vmem [shape: f32[2,3,16], index: 0, kind: input, shape index: {}]
  %s1 = inlined_call_operand.vmem [shape: f32[16,9], index: 1, kind: input, shape index: {}]
  %s2 = inlined_call_operand.vmem [shape: f32[16,1], index: 2, kind: input, shape index: {}]
  %s3 = inlined_call_operand.vmem [shape: f32[16,1], index: 3, kind: input, shape index: {}]
  %s4 = inlined_call_operand.hbm [shape: f32[2,16,16], index: 4, kind: output, shape index: {}]
  %s5 = sld [smem:[#allocation0]]
  $region49: #{conv_block.3} parent=0
    _
  %s7 = ssub.s32 1, %s5
  %s8 = scalar_select 0, %s7, %s5
  $region1: #{conv_block.3} parent=0
    #allocation2 [shape = 'u8[16384]{0}', space=vmem, size = 0x4000, scoped, tag = 'output window, operand 0']
    #allocation3 [shape = 's32[2]{0}', space=sflag, size = 0x8, scoped, tag = 'scoped memory for conv_block.3']
    %9 = vsyncpa [#allocation3], 0
    %s10 = scalar_lea.sflag [#allocation3], 1
    %11 = vsyncpa %s10, 0
    loop: start=0, step=1, limit=4
    $region2: #{conv_block.3} parent=1 // loop_pre_header
      _
    $region3: #{conv_block.3} parent=1 // loop_header
      %s13 = sphi 0, %s17
      %p14 = scmp.ge.s32.totalorder %s13, 4
      %s23 = sphi 0, %s25
      %s26 = sphi 0, %s23
      %s27 = sphi 0, %s26
      %s43 = sphi 0, %s27
      %s47 = sphi 0, %s47
      %s49 = sphi 0, %s47
      %s50 = sphi 0, %s49
      %s64 = sphi 0, %s50
      %s68 = sphi 0, %s68
      %s70 = sphi 0, %s68
      %s71 = sphi 0, %s70
      %s85 = sphi 0, %s71
      %s89 = sphi 0, %s89
      %s91 = sphi 0, %s89
      %s92 = sphi 0, %s91
      %s106 = sphi 0, %s92
      %s112 = sphi 0, %s114
      %s115 = sphi 0, %s112
      %s116 = sphi 0, %s115
      %s132 = sphi 0, %s116
    $region4: #{conv_block.3} parent=1 // loop_header_branch
      %16 = sbr.rel (%p14) target = $region8
    $region5: #{conv_block.3} parent=1 // loop_body
      %s18 = ssub.s32 %s13, 1
      %s19 = ssub.s32 %s13, 2
      %s20 = sadd.s32 %s13, 1
      %s21 = ssub.s32 %s13, %s20
      %p22 = scmp.eq.s32.totalorder %s21, 0
      %s24 = sadd.s32 %s23, 1
      %s25 = scalar_select %p22, %s23, %s24
      %p28 = pneg %p22
      %p29 = scmp.eq.s32.totalorder %s13, 1
      %p30 = por %p28, %p29
      %p31 = scmp.ne.s32.totalorder %s23, %s26
      %p32 = scmp.eq.s32.totalorder %s13, 0
      %p33 = por %p31, %p32
      %p34 = scmp.ne.s32.totalorder %s23, %s26
      %p35 = scmp.eq.s32.totalorder %s18, 1
      %p36 = por %p34, %p35
      %p37 = scmp.ne.s32.totalorder %s26, %s27
      %p38 = scmp.eq.s32.totalorder %s18, 0
      %p39 = por %p37, %p38
      %p40 = scmp.ne.s32.totalorder %s26, %s27
      %p41 = scmp.eq.s32.totalorder %s19, 1
      %p42 = por %p40, %p41
      %p44 = scmp.ne.s32.totalorder %s27, %s43
      %p45 = scmp.eq.s32.totalorder %s19, 0
      %p46 = por %p44, %p45
      %s48 = sadd.s32 %s47, 1
      %p51 = scmp.eq.s32.totalorder %s13, 1
      %p52 = scmp.ne.s32.totalorder %s47, %s49
      %p53 = scmp.eq.s32.totalorder %s13, 0
      %p54 = por %p52, %p53
      %p55 = scmp.ne.s32.totalorder %s47, %s49
      %p56 = scmp.eq.s32.totalorder %s18, 1
      %p57 = por %p55, %p56
      %p58 = scmp.ne.s32.totalorder %s49, %s50
      %p59 = scmp.eq.s32.totalorder %s18, 0
      %p60 = por %p58, %p59
      %p61 = scmp.ne.s32.totalorder %s49, %s50
      %p62 = scmp.eq.s32.totalorder %s19, 1
      %p63 = por %p61, %p62
      %p65 = scmp.ne.s32.totalorder %s50, %s64
      %p66 = scmp.eq.s32.totalorder %s19, 0
      %p67 = por %p65, %p66
      %s69 = sadd.s32 %s68, 1
      %p72 = scmp.eq.s32.totalorder %s13, 1
      %p73 = scmp.ne.s32.totalorder %s68, %s70
      %p74 = scmp.eq.s32.totalorder %s13, 0
      %p75 = por %p73, %p74
      %p76 = scmp.ne.s32.totalorder %s68, %s70
      %p77 = scmp.eq.s32.totalorder %s18, 1
      %p78 = por %p76, %p77
      %p79 = scmp.ne.s32.totalorder %s70, %s71
      %p80 = scmp.eq.s32.totalorder %s18, 0
      %p81 = por %p79, %p80
      %p82 = scmp.ne.s32.totalorder %s70, %s71
      %p83 = scmp.eq.s32.totalorder %s19, 1
      %p84 = por %p82, %p83
      %p86 = scmp.ne.s32.totalorder %s71, %s85
      %p87 = scmp.eq.s32.totalorder %s19, 0
      %p88 = por %p86, %p87
      %s90 = sadd.s32 %s89, 1
      %p93 = scmp.eq.s32.totalorder %s13, 1
      %p94 = scmp.ne.s32.totalorder %s89, %s91
      %p95 = scmp.eq.s32.totalorder %s13, 0
      %p96 = por %p94, %p95
      %p97 = scmp.ne.s32.totalorder %s89, %s91
      %p98 = scmp.eq.s32.totalorder %s18, 1
      %p99 = por %p97, %p98
      %p100 = scmp.ne.s32.totalorder %s91, %s92
      %p101 = scmp.eq.s32.totalorder %s18, 0
      %p102 = por %p100, %p101
      %p103 = scmp.ne.s32.totalorder %s91, %s92
      %p104 = scmp.eq.s32.totalorder %s19, 1
      %p105 = por %p103, %p104
      %p107 = scmp.ne.s32.totalorder %s92, %s106
      %p108 = scmp.eq.s32.totalorder %s19, 0
      %p109 = por %p107, %p108
      %s110 = ssub.s32 %s13, %s20
      %p111 = scmp.eq.s32.totalorder %s110, 0
      %s113 = sadd.s32 %s112, 1
      %s114 = scalar_select %p111, %s112, %s113
      %p117 = pneg %p111
      %p118 = scmp.eq.s32.totalorder %s13, 1
      %p119 = por %p117, %p118
      %p120 = scmp.ne.s32.totalorder %s112, %s115
      %p121 = scmp.eq.s32.totalorder %s13, 0
      %p122 = por %p120, %p121
      %p123 = scmp.ne.s32.totalorder %s112, %s115
      %p124 = scmp.eq.s32.totalorder %s18, 1
      %p125 = por %p123, %p124
      %p126 = scmp.ne.s32.totalorder %s115, %s116
      %p127 = scmp.eq.s32.totalorder %s18, 0
      %p128 = por %p126, %p127
      %p129 = scmp.ne.s32.totalorder %s115, %s116
      %p130 = scmp.eq.s32.totalorder %s19, 1
      %p131 = por %p129, %p130
      %p133 = scmp.ne.s32.totalorder %s116, %s132
      %p134 = scmp.eq.s32.totalorder %s19, 0
      %p135 = por %p133, %p134
      %p136 = scmp.le.s32.totalorder 1, %s13
      %p137 = scmp.lt.s32.totalorder %s13, 3
      %p138 = pnand %p136, %p137
      %p139 = pneg %p138
      // Predicated region
      $region9: #{conv_block.3} parent=5 // pred_check
        _
      $region10: #{conv_block.3} parent=5 // pred_check_branch
        %141 = sbr.rel (%p138) target = $region12
      $region11: #{conv_block.3} parent=5 // pred_region
        %s142 = ssub.s32 %s13, 1
        // Predicated region
        $region13: #{conv_block.3} parent=11 // pred_check
          %p143 = pneg %p60
        $region14: #{conv_block.3} parent=11 // pred_check_branch
          %145 = sbr.rel (%p143) target = $region16
        $region15: #{conv_block.3} parent=11 // pred_region
          _
        $region16: #{conv_block.3} parent=11 // pred_fallthru
          _
        // Predicated region
        $region17: #{conv_block.3} parent=11 // pred_check
          %p146 = pneg %p81
        $region18: #{conv_block.3} parent=11 // pred_check_branch
          %148 = sbr.rel (%p146) target = $region20
        $region19: #{conv_block.3} parent=11 // pred_region
          _
        $region20: #{conv_block.3} parent=11 // pred_fallthru
          _
        // Predicated region
        $region21: #{conv_block.3} parent=11 // pred_check
          %p149 = pneg %p102
        $region22: #{conv_block.3} parent=11 // pred_check_branch
          %151 = sbr.rel (%p149) target = $region24
        $region23: #{conv_block.3} parent=11 // pred_region
          _
        $region24: #{conv_block.3} parent=11 // pred_fallthru
          _
      $region12: #{conv_block.3} parent=5 // pred_fallthru
        _
      %p152 = scmp.lt.s32.totalorder %s13, 2
      // Predicated region
      $region25: #{conv_block.3} parent=5 // pred_check
        %p153 = pneg %p152
      $region26: #{conv_block.3} parent=5 // pred_check_branch
        %155 = sbr.rel (%p153) target = $region28
      $region27: #{conv_block.3} parent=5 // pred_region
        // Predicated region
        $region29: #{conv_block.3} parent=27 // pred_check
          %p156 = pneg %p33
        $region30: #{conv_block.3} parent=27 // pred_check_branch
          %158 = sbr.rel (%p156) target = $region32
        $region31: #{conv_block.3} parent=27 // pred_region
          %p159 = scmp.lt.s32.totalorder %s13, 1
          %s160 = scalar_select %p159, %s13, 1
          %s161 = smul.addr %s160, 4
          %s162 = scalar_lea.vmem %s0, %s161
        $region32: #{conv_block.3} parent=27 // pred_fallthru
          _
      $region28: #{conv_block.3} parent=5 // pred_fallthru
        _
      %p163 = scmp.le.s32.totalorder 1, %s13
      %p164 = scmp.lt.s32.totalorder %s13, 3
      %p165 = pnand %p163, %p164
      %p166 = pneg %p165
      // Predicated region
      $region33: #{conv_block.3} parent=5 // pred_check
        _
      $region34: #{conv_block.3} parent=5 // pred_check_branch
        %168 = sbr.rel (%p165) target = $region36
      $region35: #{conv_block.3} parent=5 // pred_region
        %s169 = ssub.s32 %s13, 1
        %p170 = scmp.lt.s32.totalorder %s18, 1
        %s171 = scalar_select %p170, %s18, 1
        %s172 = smul.addr %s171, 4
        %s173 = scalar_lea.vmem %s0, %s172
        %p174 = pneg %p39
        %p175 = pneg %p36
        %p176 = pneg %p60
        %p177 = pneg %p57
        %p178 = pneg %p81
        %p179 = pneg %p78
        %p180 = pneg %p102
        %p181 = pneg %p99
        %p182 = pneg %p128
        %p183 = pneg %p125
        %s184 = sand.u32 %s115, 1
        %s185 = scalar_lea.sflag [#allocation3], %s184
        %s186 = sand.u32 %s115, 1
        %s187 = smul.addr %s186, 16
        %s188 = scalar_lea.vmem [#allocation2], %s187
        %p189 = scmp.lt.s32.totalorder %s18, 1
        %s190 = scalar_select %p189, %s18, 1
        %s191 = smul.addr %s190, 4
        %s192 = scalar_lea.vmem %s0, %s191
        %v193 = vld [vmem:[%s192] sm:$0x7]
        %v194 = vld [vmem:[%s1] sm:$0xff]
        %v195 = vld [vmem:[%s1 + $0x8] sm:$0xff]
        %197 = vrot.lane.b32.xlu0 %v193, 1
        %v198 = vpop.permute.xlu0 %197
        %vm200 = vcmask 7168
        %v201 = vsel %vm200, 0.0, %v198
        %vm202 = vcmask 138240
        %v203 = vsel %vm202, %v201, 0.0
        %205 = vset.pattern.permute.xlu0 0
        %206 = vperm.xlu0 %205, %v194
        %v207 = vpop.permute.xlu0 %206
        %210 = vset.pattern.permute.xlu0 0
        %211 = vperm.xlu0 %210, %v195
        %v212 = vpop.permute.xlu0 %211
        %v214 = vlaneseq
        %v215 = vshrl.u32 %v214, 7
        %v216 = vsub.s32 0, %v215
        %v217 = vrot.slane %v203, %v216
        %v218 = vmul.f32 %v207, %v217
        %v219 = vmul.f32 %v212, %v217
        %220 = vset.pattern.permute.xlu0 1
        %221 = vperm.xlu0 %220, %v194
        %v222 = vpop.permute.xlu0 %221
        %224 = vset.pattern.permute.xlu0 1
        %225 = vperm.xlu0 %224, %v195
        %v226 = vpop.permute.xlu0 %225
        %v228 = vmul.f32 %v222, %v217
        %v229 = vmul.f32 %v226, %v217
        %232 = vrot.lane.b32.xlu0 %v228, 127
        %v233 = vpop.permute.xlu0 %232
        %234 = vrot.lane.b32.xlu0 %v229, 127
        %v235 = vpop.permute.xlu0 %234
        %v238 = vadd.f32 %v218, %v233
        %v239 = vadd.f32 %v219, %v235
        %240 = vset.pattern.permute.xlu0 2
        %241 = vperm.xlu0 %240, %v194
        %v242 = vpop.permute.xlu0 %241
        %244 = vset.pattern.permute.xlu0 2
        %245 = vperm.xlu0 %244, %v195
        %v246 = vpop.permute.xlu0 %245
        %v248 = vmul.f32 %v242, %v217
        %v249 = vmul.f32 %v246, %v217
        %252 = vrot.lane.b32.xlu0 %v248, 126
        %v253 = vpop.permute.xlu0 %252
        %254 = vrot.lane.b32.xlu0 %v249, 126
        %v255 = vpop.permute.xlu0 %254
        %v258 = vadd.f32 %v238, %v253
        %v259 = vadd.f32 %v239, %v255
        %260 = vset.pattern.permute.xlu0 3
        %261 = vperm.xlu0 %260, %v194
        %v262 = vpop.permute.xlu0 %261
        %264 = vset.pattern.permute.xlu0 3
        %265 = vperm.xlu0 %264, %v195
        %v266 = vpop.permute.xlu0 %265
        %v268 = vlaneseq
        %v269 = vshrl.u32 %v268, 7
        %v270 = vsub.s32 1, %v269
        %v271 = vrot.slane %v203, %v270
        %v272 = vmul.f32 %v262, %v271
        %v273 = vmul.f32 %v266, %v271
        %v274 = vadd.f32 %v258, %v272
        %v275 = vadd.f32 %v259, %v273
        %276 = vset.pattern.permute.xlu0 4
        %277 = vperm.xlu0 %276, %v194
        %v278 = vpop.permute.xlu0 %277
        %280 = vset.pattern.permute.xlu0 4
        %281 = vperm.xlu0 %280, %v195
        %v282 = vpop.permute.xlu0 %281
        %v284 = vmul.f32 %v278, %v271
        %v285 = vmul.f32 %v282, %v271
        %288 = vrot.lane.b32.xlu0 %v284, 127
        %v289 = vpop.permute.xlu0 %288
        %290 = vrot.lane.b32.xlu0 %v285, 127
        %v291 = vpop.permute.xlu0 %290
        %v294 = vadd.f32 %v274, %v289
        %v295 = vadd.f32 %v275, %v291
        %296 = vset.pattern.permute.xlu0 5
        %297 = vperm.xlu0 %296, %v194
        %v298 = vpop.permute.xlu0 %297
        %300 = vset.pattern.permute.xlu0 5
        %301 = vperm.xlu0 %300, %v195
        %v302 = vpop.permute.xlu0 %301
        %v304 = vmul.f32 %v298, %v271
        %v305 = vmul.f32 %v302, %v271
        %308 = vrot.lane.b32.xlu0 %v304, 126
        %v309 = vpop.permute.xlu0 %308
        %310 = vrot.lane.b32.xlu0 %v305, 126
        %v311 = vpop.permute.xlu0 %310
        %v314 = vadd.f32 %v294, %v309
        %v315 = vadd.f32 %v295, %v311
        %316 = vset.pattern.permute.xlu0 6
        %317 = vperm.xlu0 %316, %v194
        %v318 = vpop.permute.xlu0 %317
        %320 = vset.pattern.permute.xlu0 6
        %321 = vperm.xlu0 %320, %v195
        %v322 = vpop.permute.xlu0 %321
        %v324 = vlaneseq
        %v325 = vshrl.u32 %v324, 7
        %v326 = vsub.s32 2, %v325
        %v327 = vrot.slane %v203, %v326
        %v328 = vmul.f32 %v318, %v327
        %v329 = vmul.f32 %v322, %v327
        %v330 = vadd.f32 %v314, %v328
        %v331 = vadd.f32 %v315, %v329
        %332 = vset.pattern.permute.xlu0 7
        %333 = vperm.xlu0 %332, %v194
        %v334 = vpop.permute.xlu0 %333
        %336 = vset.pattern.permute.xlu0 7
        %337 = vperm.xlu0 %336, %v195
        %v338 = vpop.permute.xlu0 %337
        %v340 = vmul.f32 %v334, %v327
        %v341 = vmul.f32 %v338, %v327
        %344 = vrot.lane.b32.xlu0 %v340, 127
        %v345 = vpop.permute.xlu0 %344
        %346 = vrot.lane.b32.xlu0 %v341, 127
        %v347 = vpop.permute.xlu0 %346
        %v350 = vadd.f32 %v330, %v345
        %v351 = vadd.f32 %v331, %v347
        %352 = vset.pattern.permute.xlu0 8
        %353 = vperm.xlu0 %352, %v194
        %v354 = vpop.permute.xlu0 %353
        %356 = vset.pattern.permute.xlu0 8
        %357 = vperm.xlu0 %356, %v195
        %v358 = vpop.permute.xlu0 %357
        %v360 = vmul.f32 %v354, %v327
        %v361 = vmul.f32 %v358, %v327
        %364 = vrot.lane.b32.xlu0 %v360, 126
        %v365 = vpop.permute.xlu0 %364
        %366 = vrot.lane.b32.xlu0 %v361, 126
        %v367 = vpop.permute.xlu0 %366
        %v370 = vadd.f32 %v350, %v365
        %v371 = vadd.f32 %v351, %v367
        %v372 = vld [vmem:[%s2] sm:$0xff]
        %v373 = vld [vmem:[%s2 + $0x8] sm:$0xff]
        %375 = vset.pattern.permute.xlu0 0
        %376 = vperm.xlu0 %375, %v372
        %v377 = vpop.permute.xlu0 %376
        %380 = vset.pattern.permute.xlu0 0
        %381 = vperm.xlu0 %380, %v373
        %v382 = vpop.permute.xlu0 %381
        %v384 = vmul.f32 %v370, %v377
        %v385 = vmul.f32 %v371, %v382
        %v386 = vld [vmem:[%s3] sm:$0xff]
        %v387 = vld [vmem:[%s3 + $0x8] sm:$0xff]
        %389 = vset.pattern.permute.xlu0 0
        %390 = vperm.xlu0 %389, %v386
        %v391 = vpop.permute.xlu0 %390
        %394 = vset.pattern.permute.xlu0 0
        %395 = vperm.xlu0 %394, %v387
        %v396 = vpop.permute.xlu0 %395
        %v398 = vadd.f32 %v384, %v391
        %v399 = vadd.f32 %v385, %v396
        %v400 = vmax.f32 %v398, 0.0
        %v401 = vmax.f32 %v399, 0.0
        %vm402 = vcmask 130048
        %403 = vst.msk [vmem:[%s188] sm:$0xff] %vm402, %v400
        %404 = vst.msk [vmem:[%s188 + $0x8] sm:$0xff] %vm402, %v401
        %s405 = sand.u32 %s115, 1
        %s406 = scalar_lea.sflag [#allocation3], %s405
        %s407 = sand.u32 %s115, 1
        %s408 = smul.addr %s407, 16
        %s409 = scalar_lea.vmem [#allocation2], %s408
        // Predicated region
        $region37: #{conv_block.3} parent=35 // pred_check
          %p410 = pneg %p125
        $region38: #{conv_block.3} parent=35 // pred_check_branch
          %412 = sbr.rel (%p410) target = $region40
        $region39: #{conv_block.3} parent=35 // pred_region
          %s414 = ssub.s32 256, 256
          %415 = vsyncadd %s406, %s414
          %s416 = smul.addr %s18, 2
          %s417 = smul.addr %s416, 128
          %s418 = scalar_lea.hbm %s4, %s417
          %s419 = sshll.u32 %s409, 4
          %s420 = int_to_ptr.vmem [resolvable:$true] %s419
          %425 = dma.vmem_to_hbm [thread:$0]  %s420, 256, %s418, %s406, 128, 128, 8
        $region40: #{conv_block.3} parent=35 // pred_fallthru
          _
      $region36: #{conv_block.3} parent=5 // pred_fallthru
        _
      %p426 = scmp.le.s32.totalorder 2, %s13
      // Predicated region
      $region41: #{conv_block.3} parent=5 // pred_check
        %p427 = pneg %p426
      $region42: #{conv_block.3} parent=5 // pred_check_branch
        %429 = sbr.rel (%p427) target = $region44
      $region43: #{conv_block.3} parent=5 // pred_region
        %s430 = ssub.s32 %s13, 2
        // Predicated region
        $region45: #{conv_block.3} parent=43 // pred_check
          %p431 = pneg %p131
        $region46: #{conv_block.3} parent=43 // pred_check_branch
          %433 = sbr.rel (%p431) target = $region48
        $region47: #{conv_block.3} parent=43 // pred_region
          %s434 = sand.u32 %s116, 1
          %s435 = scalar_lea.sflag [#allocation3], %s434
          %s436 = sand.u32 %s116, 1
          %s437 = smul.addr %s436, 16
          %s438 = scalar_lea.vmem [#allocation2], %s437
          %439 = dma.done %s435, 256
        $region48: #{conv_block.3} parent=43 // pred_fallthru
          _
      $region44: #{conv_block.3} parent=5 // pred_fallthru
        _
    $region6: #{conv_block.3} parent=1 // loop_footer
      %s17 = sadd.s32 1, %s13
    $region7: #{conv_block.3} parent=1 // loop_footer_branch
      %12 = sbr.rel target = $region3
    $region8: #{conv_block.3} parent=1 // loop_exit
      _
    %440 = vsyncpa [#allocation3], 1
    %s441 = scalar_lea.sflag [#allocation3], 1
    %442 = vsyncpa %s441, 1

</llo_original>
